<compile_context>
chip_gen: v7x
topology: tpu7x:2x2x1
jax: 0.10.0
libtpu: 0.0.40
codegen_flags: <defaults>
</compile_context>

<pallas_src>
import jax
import jax.numpy as jnp
from jax.experimental import pallas as pl
from jax.experimental.pallas import tpu as pltpu

_LANE = 128  # TPU vreg lane width


def _sublane_multiple(dtype) -> int:
    """Sublane packing granularity: 8 (f32), 16 (bf16), 32 (int8/fp8)."""
    itemsize = jnp.dtype(dtype).itemsize
    return 8 * max(1, 4 // itemsize)


def _chomp_copy_kernel(x_ref, o_ref):
    # Tiled-length path: blocks are identical -> pure identity copy (the
    # chomped tail is never read from HBM).
    # Fallback path: input block carries the tail -> slice it off statically.
    l_out = o_ref.shape[-1]
    if x_ref.shape[-1] == l_out:
        o_ref[...] = x_ref[...]
    else:
        o_ref[...] = x_ref[:, :l_out]


def chomp1d(x: jax.Array, chomp_size: int, *,
            block_bytes: int = 2 * 1024 * 1024) -> jax.Array:
    """Pallas implementation of Chomp1d.forward (x[:, :, :-chomp_size])."""
    N, C, L = x.shape
    # chomp_size == 0 would mean x[:, :, :-0] -> empty tensor in PyTorch; we
    # intentionally require a strictly positive chomp that leaves data behind.
    assert 0 < chomp_size < L, "chomp_size must be in (0, L)"
    L_out = L - chomp_size
    dtype = x.dtype
    itemsize = jnp.dtype(dtype).itemsize
    sub = _sublane_multiple(dtype)

    # Collapse batch x channels into one row axis (free: row-major reshape).
    R = N * C
    x2 = x.reshape(R, L)

    if L_out >= _LANE:
        # ---- lane-dense tiled path ------------------------------------------
        # Length tile: multiple of 128, capped by the lane-aligned output
        # window and by a ~2 MiB/block byte budget at ~256 rows
        # (f32 -> tl<=2048, bf16 -> tl<=4096).
        tl_aligned_max = (L_out // _LANE) * _LANE
        rows_target = 256
        tl_budget = max(_LANE,
                        (block_bytes // (rows_target * itemsize) // _LANE) * _LANE)
        tl = min(tl_aligned_max, tl_budget)
        in_len = tl  # input block == output block: tail never fetched.

        # Row tile: full dim if it fits the byte budget, else sublane-aligned.
        tr_budget = max(sub, (block_bytes // (tl * itemsize) // sub) * sub)
        tr = R if R <= tr_budget else tr_budget

        # v7x: make sure both TensorCores get at least one grid step.
        if pl.cdiv(R, tr) * pl.cdiv(L_out, tl) == 1:
            if tl >= 2 * _LANE:
                tl = ((tl // 2) // _LANE) * _LANE
                in_len = tl
            elif tr >= 2 * sub:
                tr = max(sub, ((tr // 2) // sub) * sub)
    else:
        # ---- small-L_out fallback --------------------------------------------
        # Full-extent blocks along L (always layout-legal for any L / L_out);
        # the kernel slices the tail off statically.  Wasted tail read is
        # negligible at these sizes.
        tl = L_out
        in_len = L
        tr_budget = max(1, block_bytes // max(1, L * itemsize))
        if R <= tr_budget:
            tr = R
        else:
            tr = max(sub, (tr_budget // sub) * sub)

    grid = (pl.cdiv(R, tr), pl.cdiv(L_out, tl))

    out2 = pl.pallas_call(
        _chomp_copy_kernel,
        out_shape=jax.ShapeDtypeStruct((R, L_out), dtype),
        grid=grid,
        in_specs=[
            pl.BlockSpec((tr, in_len), lambda r, l: (r, l)),
        ],
        out_specs=pl.BlockSpec((tr, tl), lambda r, l: (r, l)),
        compiler_params=pltpu.CompilerParams(
            dimension_semantics=("parallel", "parallel"),
        ),
    )(x2)

    return out2.reshape(N, C, L_out)


if __name__ == "__main__":
    key = jax.random.PRNGKey(0)

    # 1) Small case (matches the module's intended tiny test): fallback path.
    N, C, L = 2, 4, 16
    chomp_size = 3
    x = jax.random.normal(key, (N, C, L), dtype=jnp.float32)
    out = jax.block_until_ready(chomp1d(x, chomp_size))
    ref = x[:, :, :-chomp_size]
    assert out.shape == (N, C, L - chomp_size), out.shape
    assert jnp.array_equal(out, ref), "Pallas Chomp1d mismatch (small case)"

    # 2) Forced-tiny blocks: exercises row tiling, length tiling, partial edge
    #    blocks, and OOB read-padding / masked-write handling.
    k2 = jax.random.fold_in(key, 1)
    x2 = jax.random.normal(k2, (2, 40, 1500), dtype=jnp.float32)
    out2 = jax.block_until_ready(chomp1d(x2, 100, block_bytes=16 * 1024))
    ref2 = x2[:, :, :-100]
    assert out2.shape == ref2.shape, out2.shape
    assert jnp.array_equal(out2, ref2), "Pallas Chomp1d mismatch (tiled case)"

    # 3) bf16, default byte budget: collapsed N*C rows, lane-dense copy path.
    k3 = jax.random.fold_in(key, 2)
    x3 = jax.random.normal(k3, (2, 24, 2000), dtype=jnp.bfloat16)
    out3 = jax.block_until_ready(chomp1d(x3, 176))
    ref3 = x3[:, :, :-176]
    assert out3.shape == ref3.shape, out3.shape
    assert jnp.array_equal(out3, ref3), "Pallas Chomp1d mismatch (bf16 case)"

    # 4) 128 <= L_out < 256: new lowered threshold keeps the identity-copy path.
    k4 = jax.random.fold_in(key, 3)
    x4 = jax.random.normal(k4, (2, 16, 300), dtype=jnp.float32)
    out4 = jax.block_until_ready(chomp1d(x4, 100))
    ref4 = x4[:, :, :-100]
    assert out4.shape == ref4.shape, out4.shape
    assert jnp.array_equal(out4, ref4), "Pallas Chomp1d mismatch (short-L case)"

    # 5) Would-be single-block input: v7x split heuristic forces >=2 grid steps.
    k5 = jax.random.fold_in(key, 4)
    x5 = jax.random.normal(k5, (1, 8, 300), dtype=jnp.float32)
    out5 = jax.block_until_ready(chomp1d(x5, 44))
    ref5 = x5[:, :, :-44]
    assert out5.shape == ref5.shape, out5.shape
    assert jnp.array_equal(out5, ref5), "Pallas Chomp1d mismatch (single-block case)"

    print("KERNEL_OK")
</pallas_src>

<mosaic_0001>
module attributes {stable_mosaic.version = 11 : i64} {
  func.func @_chomp_copy_kernel(%arg0: i32, %arg1: i32, %arg2: memref<8x16xf32, #tpu.memory_space<vmem>>, %arg3: memref<8x13xf32, #tpu.memory_space<vmem>>) attributes {dimension_semantics = [#tpu.dimension_semantics<parallel>, #tpu.dimension_semantics<parallel>], iteration_bounds = array<i64: 1, 1>, scalar_prefetch = 0 : i64, scratch_operands = 0 : i64, tpu.core_type = #tpu.core_type<tc>, window_params = [{transform_indices = @transform_0, window_bounds = array<i64: 8, 16>}, {transform_indices = @transform_1, window_bounds = array<i64: 8, 13>}]} {
    %c0 = arith.constant 0 : index
    %c0_0 = arith.constant 0 : index
    %0 = vector.load %arg2[%c0, %c0_0] : memref<8x16xf32, #tpu.memory_space<vmem>>, vector<8x13xf32>
    %c0_1 = arith.constant 0 : index
    %c0_2 = arith.constant 0 : index
    %1 = vector.load %arg3[%c0_1, %c0_2] : memref<8x13xf32, #tpu.memory_space<vmem>>, vector<8x13xf32>
    tpu.vector_store %arg3[%c0_1, %c0_2], %0 {strides = array<i32>} : memref<8x13xf32, #tpu.memory_space<vmem>>, vector<8x13xf32>,
    return
  }
  func.func @transform_0(%arg0: i32, %arg1: i32) -> (i32, i32) {
    %c0_i32 = arith.constant 0 : i32
    return %arg0, %arg1 : i32, i32
  }
  func.func @transform_1(%arg0: i32, %arg1: i32) -> (i32, i32) {
    %c0_i32 = arith.constant 0 : i32
    return %arg0, %arg1 : i32, i32
  }
}

</mosaic_0001>

<llo_original>
// kernel: tpu_custom_call.1
$region0: #{tpu_custom_call.1}
  #allocation0 [shape = 'u32[]', space=smem, size = 0x4, offset = 0x4, fixed_abs, tag = 'smem constant byte address 0x4 - core index']
  #allocation1 [shape = 'u32[144,128]{1,0:T(1,128)}', space=vmem, size = 0x12000, scoped, tag = 'internal scratch']
  %s0 = inlined_call_operand.hbm [shape: f32[8,16], index: 0, kind: input, shape index: {}]
  %s1 = inlined_call_operand.hbm [shape: f32[8,13], index: 1, kind: output, shape index: {}]
  %s2 = sld [smem:[#allocation0]]
  $region18: #{tpu_custom_call.1} parent=0
    _
  %s4 = ssub.s32 1, %s2
  %s5 = scalar_select 0, %s4, %s2
  $region1: #{tpu_custom_call.1} parent=0
    #allocation2 [shape = 'u8[4096]{0}', space=vmem, size = 0x1000, scoped, tag = 'input window, operand 0, single buffered']
    #allocation3 [shape = 's32[1]{0}', space=sflag, size = 0x4, scoped, tag = 'scoped memory for tpu_custom_call.1']
    #allocation4 [shape = 's32[1]{0}', space=sflag, size = 0x4, scoped, tag = 'scoped memory for tpu_custom_call.1']
    #allocation5 [shape = 'u8[4096]{0}', space=vmem, size = 0x1000, scoped, tag = 'output window, operand 0, single buffered']
    %6 = vsyncpa [#allocation3], 0
    %7 = vsyncpa [#allocation4], 0
    // Predicated region
    $region2: #{tpu_custom_call.1} parent=1 // pred_check
      _
    $region3: #{tpu_custom_call.1} parent=1 // pred_check_branch
      %9 = sbr.rel (0) target = $region5
    $region4: #{tpu_custom_call.1} parent=1 // pred_region
      %s11 = ssub.s32 128, 128
      %12 = vsyncadd [#allocation3], %s11
      %s14 = sshll.u32 [#allocation2], 4
      %s15 = int_to_ptr.vmem [resolvable:$true] %s14
      %17 = dma.hbm_to_vmem [thread:$0]  %s0, 128, %s15, [#allocation3]
    $region5: #{tpu_custom_call.1} parent=1 // pred_fallthru
      _
    // Predicated region
    $region6: #{tpu_custom_call.1} parent=1 // pred_check
      _
    $region7: #{tpu_custom_call.1} parent=1 // pred_check_branch
      %19 = sbr.rel (0) target = $region9
    $region8: #{tpu_custom_call.1} parent=1 // pred_region
      %20 = dma.done [#allocation3], 128
    $region9: #{tpu_custom_call.1} parent=1 // pred_fallthru
      _
    %v21 = vld [vmem:[#allocation2] sm:$0xff]
    %vm22 = vcmask 105472
    %23 = vst.msk [vmem:[#allocation5] sm:$0xff] %vm22, %v21
    // Predicated region
    $region10: #{tpu_custom_call.1} parent=1 // pred_check
      _
    $region11: #{tpu_custom_call.1} parent=1 // pred_check_branch
      %25 = sbr.rel (0) target = $region13
    $region12: #{tpu_custom_call.1} parent=1 // pred_region
      %s27 = ssub.s32 128, 128
      %28 = vsyncadd [#allocation4], %s27
      %s30 = sshll.u32 [#allocation5], 4
      %s31 = int_to_ptr.vmem [resolvable:$true] %s30
      %33 = dma.vmem_to_hbm [thread:$0]  %s31, 128, %s1, [#allocation4]
    $region13: #{tpu_custom_call.1} parent=1 // pred_fallthru
      _
    // Predicated region
    $region14: #{tpu_custom_call.1} parent=1 // pred_check
      _
    $region15: #{tpu_custom_call.1} parent=1 // pred_check_branch
      %35 = sbr.rel (0) target = $region17
    $region16: #{tpu_custom_call.1} parent=1 // pred_region
      %36 = dma.done [#allocation4], 128
    $region17: #{tpu_custom_call.1} parent=1 // pred_fallthru
      _
    %37 = vsyncpa [#allocation3], 1
    %38 = vsyncpa [#allocation4], 1

</llo_original>
